<compile_context>
chip_gen: v7x
topology: tpu7x:2x2x1
jax: 0.10.0
libtpu: 0.0.40
codegen_flags: <defaults>
</compile_context>

<pallas_src>
from functools import partial

import jax
import jax.numpy as jnp
from jax import lax
from jax.experimental import pallas as pl
from jax.experimental.pallas import tpu as pltpu

BN_EPS = 1e-5


def _conv_stats_kernel(p_ref, w_ref, conv_ref, stats_ref):
    """One M-tile: conv = patches @ W on the MXU (bf16 in, f32 accumulation);
    store the conv tile as bf16 and emit (2, 8, Cout) sum / sum-of-squares
    sublane partials for the BatchNorm batch statistics."""
    acc = jnp.dot(p_ref[...], w_ref[...],
                  preferred_element_type=jnp.float32)        # (tile_m, Cout) f32
    conv_ref[...] = acc.astype(conv_ref.dtype)               # bf16 slab to HBM

    tile_m, cout = acc.shape
    if tile_m % 8 == 0:
        # Group rows in whole vregs: reducing over axis 0 is pure VALU adds
        # (no XLU cross-sublane tree); the 8 sublanes are summed in the
        # tiny JAX finalize instead.
        grp = acc.reshape(tile_m // 8, 8, cout)
        stats_ref[0, 0] = jnp.sum(grp, axis=0)               # (8, Cout) sum
        stats_ref[0, 1] = jnp.sum(grp * grp, axis=0)         # (8, Cout) sum sq
    else:
        # Fallback (single full-M tile with M % 8 != 0): spread the exact sum
        # evenly over the 8 sublanes (x/8 is exact in binary).
        s = jnp.sum(acc, axis=0, keepdims=True) * 0.125
        sq = jnp.sum(acc * acc, axis=0, keepdims=True) * 0.125
        stats_ref[0, 0] = jnp.broadcast_to(s, (8, cout))
        stats_ref[0, 1] = jnp.broadcast_to(sq, (8, cout))


def _pick_tile_m(M, K, Cout, *, max_rows=4096, vmem_budget=8 << 20):
    """Largest divisor of M that is a multiple of 8, capped so the
    double-buffered per-step footprint stays well inside VMEM."""
    row_bytes = 2 * (K * 2) + 2 * (Cout * 2)      # dbl-buffered bf16 in + out
    cap = max(8, min(max_rows, vmem_budget // row_bytes))
    tile = None
    for d in range(8, int(cap) + 1, 8):
        if M % d == 0:
            tile = d
    return tile if tile is not None else M        # full-M block is always legal


@partial(jax.jit, static_argnames=("max_tile_rows",))
def conv_bn(x_nchw, weight, bias, gamma, beta, *, max_tile_rows=4096):
    """x_nchw: (N, Cin, H, W); weight: (Cout, Cin, 3, 3). Returns NCHW f32."""
    N, Cin, H, W = x_nchw.shape
    Cout = weight.shape[0]
    M = N * H * W
    K = Cin * 9

    # Conv bias is mathematically cancelled by the BN mean subtraction.
    del bias

    # ---- im2col (glue, plain JAX): (M, K) bf16, NO K padding in HBM --------
    x_nhwc = jnp.transpose(x_nchw, (0, 2, 3, 1))              # (N,H,W,Cin)
    xp = jnp.pad(x_nhwc, ((0, 0), (1, 1), (1, 1), (0, 0)))
    taps = [xp[:, ky:ky + H, kx:kx + W, :]
            for ky in range(3) for kx in range(3)]            # 9 x (N,H,W,Cin)
    patches = jnp.concatenate(taps, axis=-1)                  # (N,H,W,9*Cin)
    patches = patches.reshape(M, K).astype(jnp.bfloat16)

    # weight (Cout, Cin, 3, 3) -> (K, Cout), same (ky, kx, ci) ordering, bf16
    w_mat = jnp.transpose(weight, (2, 3, 1, 0)).reshape(K, Cout)
    w_mat = w_mat.astype(jnp.bfloat16)

    # ---- tiling + explicit VMEM budget -------------------------------------
    tile_m = _pick_tile_m(M, K, Cout, max_rows=max_tile_rows)
    n_tiles = M // tile_m
    per_step = (2 * tile_m * K * 2        # double-buffered bf16 patches block
                + 2 * tile_m * Cout * 2   # double-buffered bf16 conv block
                + K * Cout * 2            # resident bf16 weight
                + 2 * 2 * 8 * Cout * 4)   # double-buffered f32 stats block
    vmem_limit = int(min(48 << 20, max(32 << 20, 4 * per_step)))

    # ---- Pallas pass: conv tiles (bf16) + per-tile BN partial stats --------
    conv_flat, stats = pl.pallas_call(
        _conv_stats_kernel,
        out_shape=(jax.ShapeDtypeStruct((M, Cout), jnp.bfloat16),
                   jax.ShapeDtypeStruct((n_tiles, 2, 8, Cout), jnp.float32)),
        grid=(n_tiles,),
        in_specs=[
            pl.BlockSpec((tile_m, K), lambda i: (i, 0)),
            # constant operand: whole weight resident in VMEM, no dbl-buffer
            pl.BlockSpec(memory_space=pltpu.MemorySpace.VMEM),
        ],
        out_specs=(
            pl.BlockSpec((tile_m, Cout), lambda i: (i, 0)),
            pl.BlockSpec((1, 2, 8, Cout), lambda i: (i, 0, 0, 0)),
        ),
        compiler_params=pltpu.CompilerParams(
            dimension_semantics=("parallel",),   # per-tile stats -> no carry
            vmem_limit_bytes=vmem_limit),
    )(patches, w_mat)

    # ---- finalize: tiny per-channel reduction (plain JAX) ------------------
    m_f = jnp.float32(M)
    sum_c = jnp.sum(stats[:, 0], axis=(0, 1))                 # (Cout,)
    sumsq_c = jnp.sum(stats[:, 1], axis=(0, 1))               # (Cout,)
    mean = sum_c / m_f
    # E[x^2] - mean^2 in f32; clamp guards tiny negative values from
    # cancellation (see review note; switch to shifted sums if this tightens).
    var = jnp.maximum(sumsq_c / m_f - mean * mean, 0.0)
    inv_std = lax.rsqrt(var + BN_EPS)
    scale = gamma.astype(jnp.float32) * inv_std               # (Cout,)
    shift = beta.astype(jnp.float32) - mean * scale           # (Cout,)

    # ---- epilogue: y = conv*scale + shift, fused by XLA into the NCHW
    # transpose (one read of the bf16 conv slab, one write of the output).
    conv_nhwc = conv_flat.reshape(N, H, W, Cout)              # free reshape
    y = conv_nhwc.astype(jnp.float32) * scale + shift
    return jnp.transpose(y, (0, 3, 1, 2))                     # NCHW, f32


def _reference(x, weight, bias, gamma, beta):
    """Plain-JAX reference: conv2d(pad=1) + BatchNorm2d (training mode)."""
    conv = lax.conv_general_dilated(
        x, weight, window_strides=(1, 1), padding=((1, 1), (1, 1)),
        dimension_numbers=("NCHW", "OIHW", "NCHW"))
    conv = conv + bias.reshape(1, -1, 1, 1)
    mean = jnp.mean(conv, axis=(0, 2, 3), keepdims=True)
    var = jnp.mean((conv - mean) ** 2, axis=(0, 2, 3), keepdims=True)
    return ((conv - mean) * lax.rsqrt(var + BN_EPS)
            * gamma.reshape(1, -1, 1, 1) + beta.reshape(1, -1, 1, 1))


if __name__ == "__main__":
    N, Cin, Cout, H, W = 2, 4, 8, 16, 16

    key = jax.random.PRNGKey(0)
    kx, kw, kb = jax.random.split(key, 3)

    x = jax.random.normal(kx, (N, Cin, H, W), dtype=jnp.float32)
    fan_in = Cin * 3 * 3
    bound = 1.0 / (fan_in ** 0.5)
    weight = jax.random.uniform(kw, (Cout, Cin, 3, 3), jnp.float32, -bound, bound)
    bias = jax.random.uniform(kb, (Cout,), jnp.float32, -bound, bound)
    gamma = jnp.ones((Cout,), jnp.float32)   # nn.BatchNorm2d weight init
    beta = jnp.zeros((Cout,), jnp.float32)   # nn.BatchNorm2d bias init

    out = conv_bn(x, weight, bias, gamma, beta)
    out = jax.block_until_ready(out)

    ref = _reference(x, weight, bias, gamma, beta)
    assert out.shape == (N, Cout, H, W)
    # bf16 MXU operands + bf16 conv slab (f32 accumulation/stats) -> relaxed
    # tolerance vs the f32 reference.
    err = float(jnp.max(jnp.abs(out - ref)))
    assert err < 5e-2, f"max abs err {err}"

    print("KERNEL_OK")
</pallas_src>

<mosaic_0001>
module attributes {stable_mosaic.version = 11 : i64} {
  func.func @_conv_stats_kernel(%arg0: i32, %arg1: memref<512x36xbf16, #tpu.memory_space<vmem>>, %arg2: memref<36x8xbf16, #tpu.memory_space<vmem>>, %arg3: memref<512x8xbf16, #tpu.memory_space<vmem>>, %arg4: memref<1x2x8x8xf32, #tpu.memory_space<vmem>>) attributes {dimension_semantics = [#tpu.dimension_semantics<parallel>], iteration_bounds = array<i64: 1>, scalar_prefetch = 0 : i64, scratch_operands = 0 : i64, tpu.core_type = #tpu.core_type<tc>, window_params = [{transform_indices = @transform_0, window_bounds = array<i64: 512, 36>}, {pipeline_mode = #tpu.pipeline_mode<synchronous>, transform_indices = @transform_1, window_bounds = array<i64: 36, 8>}, {transform_indices = @transform_2, window_bounds = array<i64: 512, 8>}, {transform_indices = @transform_3, window_bounds = array<i64: 1, 2, 8, 8>}]} {
    %c0 = arith.constant 0 : index
    %c0_0 = arith.constant 0 : index
    %0 = vector.load %arg1[%c0, %c0_0] : memref<512x36xbf16, #tpu.memory_space<vmem>>, vector<512x36xbf16>
    %c0_1 = arith.constant 0 : index
    %c0_2 = arith.constant 0 : index
    %1 = vector.load %arg2[%c0_1, %c0_2] : memref<36x8xbf16, #tpu.memory_space<vmem>>, vector<36x8xbf16>
    %cst = arith.constant dense<0.000000e+00> : vector<512x8xf32>
    %2 = tpu.matmul %0, %1, %cst {dimension_numbers = #tpu.dot_dimension_numbers<[1], [0], [0], [1], [0, 0, 1, 1], [], []>} : vector<512x36xbf16>, vector<36x8xbf16>, vector<512x8xf32> -> vector<512x8xf32>
    %3 = arith.truncf %2 : vector<512x8xf32> to vector<512x8xbf16>
    %c0_3 = arith.constant 0 : index
    %c0_4 = arith.constant 0 : index
    %4 = vector.load %arg3[%c0_3, %c0_4] : memref<512x8xbf16, #tpu.memory_space<vmem>>, vector<512x8xbf16>
    tpu.vector_store %arg3[%c0_3, %c0_4], %3 {strides = array<i32>} : memref<512x8xbf16, #tpu.memory_space<vmem>>, vector<512x8xbf16>,
    %5 = vector.shape_cast %2 : vector<512x8xf32> to vector<64x8x8xf32>
    %cst_5 = arith.constant dense<0.000000e+00> : vector<8x8xf32>
    %6 = vector.multi_reduction <add>, %5, %cst_5 [0] : vector<64x8x8xf32> to vector<8x8xf32>
    %c0_6 = arith.constant 0 : index
    %c0_7 = arith.constant 0 : index
    %c0_8 = arith.constant 0 : index
    %c0_9 = arith.constant 0 : index
    %7 = vector.load %arg4[%c0_6, %c0_7, %c0_8, %c0_9] : memref<1x2x8x8xf32, #tpu.memory_space<vmem>>, vector<1x1x8x8xf32>
    %8 = vector.shape_cast %7 : vector<1x1x8x8xf32> to vector<8x8xf32>
    %9 = vector.shape_cast %6 : vector<8x8xf32> to vector<1x1x8x8xf32>
    tpu.vector_store %arg4[%c0_6, %c0_7, %c0_8, %c0_9], %9 {strides = array<i32>} : memref<1x2x8x8xf32, #tpu.memory_space<vmem>>, vector<1x1x8x8xf32>,
    %10 = arith.mulf %5, %5 : vector<64x8x8xf32>
    %cst_10 = arith.constant dense<0.000000e+00> : vector<8x8xf32>
    %11 = vector.multi_reduction <add>, %10, %cst_10 [0] : vector<64x8x8xf32> to vector<8x8xf32>
    %c0_11 = arith.constant 0 : index
    %c1 = arith.constant 1 : index
    %c0_12 = arith.constant 0 : index
    %c0_13 = arith.constant 0 : index
    %12 = vector.load %arg4[%c0_11, %c1, %c0_12, %c0_13] : memref<1x2x8x8xf32, #tpu.memory_space<vmem>>, vector<1x1x8x8xf32>
    %13 = vector.shape_cast %12 : vector<1x1x8x8xf32> to vector<8x8xf32>
    %14 = vector.shape_cast %11 : vector<8x8xf32> to vector<1x1x8x8xf32>
    tpu.vector_store %arg4[%c0_11, %c1, %c0_12, %c0_13], %14 {strides = array<i32>} : memref<1x2x8x8xf32, #tpu.memory_space<vmem>>, vector<1x1x8x8xf32>,
    return
  }
  func.func @transform_0(%arg0: i32) -> (i32, i32) {
    %c0_i32 = arith.constant 0 : i32
    %c0_i32_0 = arith.constant 0 : i32
    return %arg0, %c0_i32 : i32, i32
  }
  func.func @transform_1(%arg0: i32) -> (i32, i32) {
    %c0_i32 = arith.constant 0 : i32
    %c0_i32_0 = arith.constant 0 : i32
    %c0_i32_1 = arith.constant 0 : i32
    return %c0_i32, %c0_i32_0 : i32, i32
  }
  func.func @transform_2(%arg0: i32) -> (i32, i32) {
    %c0_i32 = arith.constant 0 : i32
    %c0_i32_0 = arith.constant 0 : i32
    return %arg0, %c0_i32 : i32, i32
  }
  func.func @transform_3(%arg0: i32) -> (i32, i32, i32, i32) {
    %c0_i32 = arith.constant 0 : i32
    %c0_i32_0 = arith.constant 0 : i32
    %c0_i32_1 = arith.constant 0 : i32
    %c0_i32_2 = arith.constant 0 : i32
    return %arg0, %c0_i32, %c0_i32_0, %c0_i32_1 : i32, i32, i32, i32
  }
}

</mosaic_0001>

<llo_original>
// kernel: conv_bn.1
$region0: #{conv_bn.1}
  #allocation0 [shape = 'u32[]', space=smem, size = 0x4, offset = 0x4, fixed_abs, tag = 'smem constant byte address 0x4 - core index']
  #allocation1 [shape = 'u32[144,128]{1,0:T(1,128)}', space=vmem, size = 0x12000, scoped, tag = 'internal scratch']
  %s0 = inlined_call_operand.vmem [shape: bf16[512,36], index: 0, kind: input, shape index: {}]
  %s1 = inlined_call_operand.vmem [shape: bf16[36,8], index: 1, kind: input, shape index: {}]
  %s2 = inlined_call_operand.vmem [shape: bf16[512,8], index: 2, kind: output, shape index: {0}]
  %s3 = inlined_call_operand.vmem [shape: f32[1,2,8,8], index: 3, kind: output, shape index: {1}]
  %4 = xla_tuple %s2, %s3
  %s5 = sld [smem:[#allocation0]]
  $region26: #{conv_bn.1} parent=0
    _
  %s7 = ssub.s32 1, %s5
  %s8 = scalar_select 0, %s7, %s5
  // Predicated region
  $region2: #{conv_bn.1} parent=0 // pred_check
    _
  $region3: #{conv_bn.1} parent=0 // pred_check_branch
    %10 = sbr.rel (0) target = $region5
  $region4: #{conv_bn.1} parent=0 // pred_region
    _
  $region5: #{conv_bn.1} parent=0 // pred_fallthru
    _
  // Predicated region
  $region6: #{conv_bn.1} parent=0 // pred_check
    _
  $region7: #{conv_bn.1} parent=0 // pred_check_branch
    %12 = sbr.rel (0) target = $region9
  $region8: #{conv_bn.1} parent=0 // pred_region
    _
  $region9: #{conv_bn.1} parent=0 // pred_fallthru
    _
  %v14 = vld [vmem:[%s0] sm:$0xf]
  %v15 = vld [vmem:[%s0 + $0x4] sm:$0xf]
  %v16 = vld [vmem:[%s0 + $0x8] sm:$0xf]
  %v17 = vld [vmem:[%s0 + $0xc] sm:$0xf]
  %v18 = vld [vmem:[%s0 + $0x10] sm:$0xf]
  %v19 = vld [vmem:[%s0 + $0x14] sm:$0xf]
  %v20 = vld [vmem:[%s0 + $0x18] sm:$0xf]
  %v21 = vld [vmem:[%s0 + $0x1c] sm:$0xf]
  %v22 = vld [vmem:[%s0 + $0x20] sm:$0xf]
  %v23 = vld [vmem:[%s0 + $0x24] sm:$0xf]
  %v24 = vld [vmem:[%s0 + $0x28] sm:$0xf]
  %v25 = vld [vmem:[%s0 + $0x2c] sm:$0xf]
  %v26 = vld [vmem:[%s0 + $0x30] sm:$0xf]
  %v27 = vld [vmem:[%s0 + $0x34] sm:$0xf]
  %v28 = vld [vmem:[%s0 + $0x38] sm:$0xf]
  %v29 = vld [vmem:[%s0 + $0x3c] sm:$0xf]
  %v30 = vld [vmem:[%s0 + $0x40] sm:$0xf]
  %v31 = vld [vmem:[%s0 + $0x44] sm:$0xf]
  %v32 = vld [vmem:[%s0 + $0x48] sm:$0xf]
  %v33 = vld [vmem:[%s0 + $0x4c] sm:$0xf]
  %v34 = vld [vmem:[%s0 + $0x50] sm:$0xf]
  %v35 = vld [vmem:[%s0 + $0x54] sm:$0xf]
  %v36 = vld [vmem:[%s0 + $0x58] sm:$0xf]
  %v37 = vld [vmem:[%s0 + $0x5c] sm:$0xf]
  %v38 = vld [vmem:[%s0 + $0x60] sm:$0xf]
  %v39 = vld [vmem:[%s0 + $0x64] sm:$0xf]
  %v40 = vld [vmem:[%s0 + $0x68] sm:$0xf]
  %v41 = vld [vmem:[%s0 + $0x6c] sm:$0xf]
  %v42 = vld [vmem:[%s0 + $0x70] sm:$0xf]
  %v43 = vld [vmem:[%s0 + $0x74] sm:$0xf]
  %v44 = vld [vmem:[%s0 + $0x78] sm:$0xf]
  %v45 = vld [vmem:[%s0 + $0x7c] sm:$0xf]
  %v46 = vld [vmem:[%s0 + $0x80] sm:$0xf]
  %v47 = vld [vmem:[%s0 + $0x84] sm:$0xf]
  %v48 = vld [vmem:[%s0 + $0x88] sm:$0xf]
  %v49 = vld [vmem:[%s0 + $0x8c] sm:$0xf]
  %v50 = vld [vmem:[%s0 + $0x90] sm:$0xf]
  %v51 = vld [vmem:[%s0 + $0x94] sm:$0xf]
  %v52 = vld [vmem:[%s0 + $0x98] sm:$0xf]
  %v53 = vld [vmem:[%s0 + $0x9c] sm:$0xf]
  %v54 = vld [vmem:[%s0 + $0xa0] sm:$0xf]
  %v55 = vld [vmem:[%s0 + $0xa4] sm:$0xf]
  %v56 = vld [vmem:[%s0 + $0xa8] sm:$0xf]
  %v57 = vld [vmem:[%s0 + $0xac] sm:$0xf]
  %v58 = vld [vmem:[%s0 + $0xb0] sm:$0xf]
  %v59 = vld [vmem:[%s0 + $0xb4] sm:$0xf]
  %v60 = vld [vmem:[%s0 + $0xb8] sm:$0xf]
  %v61 = vld [vmem:[%s0 + $0xbc] sm:$0xf]
  %v62 = vld [vmem:[%s0 + $0xc0] sm:$0xf]
  %v63 = vld [vmem:[%s0 + $0xc4] sm:$0xf]
  %v64 = vld [vmem:[%s0 + $0xc8] sm:$0xf]
  %v65 = vld [vmem:[%s0 + $0xcc] sm:$0xf]
  %v66 = vld [vmem:[%s0 + $0xd0] sm:$0xf]
  %v67 = vld [vmem:[%s0 + $0xd4] sm:$0xf]
  %v68 = vld [vmem:[%s0 + $0xd8] sm:$0xf]
  %v69 = vld [vmem:[%s0 + $0xdc] sm:$0xf]
  %v70 = vld [vmem:[%s0 + $0xe0] sm:$0xf]
  %v71 = vld [vmem:[%s0 + $0xe4] sm:$0xf]
  %v72 = vld [vmem:[%s0 + $0xe8] sm:$0xf]
  %v73 = vld [vmem:[%s0 + $0xec] sm:$0xf]
  %v74 = vld [vmem:[%s0 + $0xf0] sm:$0xf]
  %v75 = vld [vmem:[%s0 + $0xf4] sm:$0xf]
  %v76 = vld [vmem:[%s0 + $0xf8] sm:$0xf]
  %v77 = vld [vmem:[%s0 + $0xfc] sm:$0xf]
  %v78 = vld [vmem:[%s1] sm:$0xf]
  %v79 = vld [vmem:[%s1 + $0x4] sm:$0xf]
  %v80 = vld [vmem:[%s1 + $0x8] sm:$0xf]
  %v81 = vld [vmem:[%s1 + $0xc] sm:$0xf]
  %v82 = vld [vmem:[%s1 + $0x10] sm:$0x3]
  %v147 = vunpack.c.l.b16 %v14
  %v148 = vunpack.c.l.b16 %v15
  %v149 = vunpack.c.l.b16 %v16
  %v150 = vunpack.c.l.b16 %v17
  %v151 = vunpack.c.l.b16 %v18
  %v152 = vunpack.c.l.b16 %v19
  %v153 = vunpack.c.l.b16 %v20
  %v154 = vunpack.c.l.b16 %v21
  %v155 = vunpack.c.l.b16 %v22
  %v156 = vunpack.c.l.b16 %v23
  %v157 = vunpack.c.l.b16 %v24
  %v158 = vunpack.c.l.b16 %v25
  %v159 = vunpack.c.l.b16 %v26
  %v160 = vunpack.c.l.b16 %v27
  %v161 = vunpack.c.l.b16 %v28
  %v162 = vunpack.c.l.b16 %v29
  %v163 = vunpack.c.l.b16 %v30
  %v164 = vunpack.c.l.b16 %v31
  %v165 = vunpack.c.l.b16 %v32
  %v166 = vunpack.c.l.b16 %v33
  %v167 = vunpack.c.l.b16 %v34
  %v168 = vunpack.c.l.b16 %v35
  %v169 = vunpack.c.l.b16 %v36
  %v170 = vunpack.c.l.b16 %v37
  %v171 = vunpack.c.l.b16 %v38
  %v172 = vunpack.c.l.b16 %v39
  %v173 = vunpack.c.l.b16 %v40
  %v174 = vunpack.c.l.b16 %v41
  %v175 = vunpack.c.l.b16 %v42
  %v176 = vunpack.c.l.b16 %v43
  %v177 = vunpack.c.l.b16 %v44
  %v178 = vunpack.c.l.b16 %v45
  %v179 = vunpack.c.l.b16 %v46
  %v180 = vunpack.c.l.b16 %v47
  %v181 = vunpack.c.l.b16 %v48
  %v182 = vunpack.c.l.b16 %v49
  %v183 = vunpack.c.l.b16 %v50
  %v184 = vunpack.c.l.b16 %v51
  %v185 = vunpack.c.l.b16 %v52
  %v186 = vunpack.c.l.b16 %v53
  %v187 = vunpack.c.l.b16 %v54
  %v188 = vunpack.c.l.b16 %v55
  %v189 = vunpack.c.l.b16 %v56
  %v190 = vunpack.c.l.b16 %v57
  %v191 = vunpack.c.l.b16 %v58
  %v192 = vunpack.c.l.b16 %v59
  %v193 = vunpack.c.l.b16 %v60
  %v194 = vunpack.c.l.b16 %v61
  %v195 = vunpack.c.l.b16 %v62
  %v196 = vunpack.c.l.b16 %v63
  %v197 = vunpack.c.l.b16 %v64
  %v198 = vunpack.c.l.b16 %v65
  %v199 = vunpack.c.l.b16 %v66
  %v200 = vunpack.c.l.b16 %v67
  %v201 = vunpack.c.l.b16 %v68
  %v202 = vunpack.c.l.b16 %v69
  %v203 = vunpack.c.l.b16 %v70
  %v204 = vunpack.c.l.b16 %v71
  %v205 = vunpack.c.l.b16 %v72
  %v206 = vunpack.c.l.b16 %v73
  %v207 = vunpack.c.l.b16 %v74
  %v208 = vunpack.c.l.b16 %v75
  %v209 = vunpack.c.l.b16 %v76
  %v210 = vunpack.c.l.b16 %v77
  %v211 = vpack.c.b16 %v148, %v147
  %v212 = vpack.c.b16 %v150, %v149
  %v213 = vpack.c.b16 %v152, %v151
  %v214 = vpack.c.b16 %v154, %v153
  %v215 = vpack.c.b16 %v156, %v155
  %v216 = vpack.c.b16 %v158, %v157
  %v217 = vpack.c.b16 %v160, %v159
  %v218 = vpack.c.b16 %v162, %v161
  %v219 = vpack.c.b16 %v164, %v163
  %v220 = vpack.c.b16 %v166, %v165
  %v221 = vpack.c.b16 %v168, %v167
  %v222 = vpack.c.b16 %v170, %v169
  %v223 = vpack.c.b16 %v172, %v171
  %v224 = vpack.c.b16 %v174, %v173
  %v225 = vpack.c.b16 %v176, %v175
  %v226 = vpack.c.b16 %v178, %v177
  %v227 = vpack.c.b16 %v180, %v179
  %v228 = vpack.c.b16 %v182, %v181
  %v229 = vpack.c.b16 %v184, %v183
  %v230 = vpack.c.b16 %v186, %v185
  %v231 = vpack.c.b16 %v188, %v187
  %v232 = vpack.c.b16 %v190, %v189
  %v233 = vpack.c.b16 %v192, %v191
  %v234 = vpack.c.b16 %v194, %v193
  %v235 = vpack.c.b16 %v196, %v195
  %v236 = vpack.c.b16 %v198, %v197
  %v237 = vpack.c.b16 %v200, %v199
  %v238 = vpack.c.b16 %v202, %v201
  %v239 = vpack.c.b16 %v204, %v203
  %v240 = vpack.c.b16 %v206, %v205
  %v241 = vpack.c.b16 %v208, %v207
  %v242 = vpack.c.b16 %v210, %v209
  %v248 = vunpack.c.l.b16 %v78
  %v249 = vunpack.c.l.b16 %v79
  %v250 = vunpack.c.l.b16 %v80
  %v251 = vunpack.c.l.b16 %v81
  %v252 = vunpack.c.l.b16 %v82
  %v253 = vpack.c.b16 %v249, %v248
  %v254 = vpack.c.b16 %v251, %v250
  %v255 = vpack.c.b16 %v252, %v252
  %vm258 = vcmask 293888
  %v260 = vsel %vm258, %v211, 0
  %v263 = vsel %vm258, %v212, 0
  %v266 = vsel %vm258, %v213, 0
  %v269 = vsel %vm258, %v214, 0
  %v272 = vsel %vm258, %v215, 0
  %v275 = vsel %vm258, %v216, 0
  %v278 = vsel %vm258, %v217, 0
  %v281 = vsel %vm258, %v218, 0
  %v284 = vsel %vm258, %v219, 0
  %v287 = vsel %vm258, %v220, 0
  %v290 = vsel %vm258, %v221, 0
  %v293 = vsel %vm258, %v222, 0
  %v296 = vsel %vm258, %v223, 0
  %v299 = vsel %vm258, %v224, 0
  %v302 = vsel %vm258, %v225, 0
  %v305 = vsel %vm258, %v226, 0
  %v308 = vsel %vm258, %v227, 0
  %v311 = vsel %vm258, %v228, 0
  %v314 = vsel %vm258, %v229, 0
  %v317 = vsel %vm258, %v230, 0
  %v320 = vsel %vm258, %v231, 0
  %v323 = vsel %vm258, %v232, 0
  %v326 = vsel %vm258, %v233, 0
  %v329 = vsel %vm258, %v234, 0
  %v332 = vsel %vm258, %v235, 0
  %v335 = vsel %vm258, %v236, 0
  %v338 = vsel %vm258, %v237, 0
  %v341 = vsel %vm258, %v238, 0
  %v344 = vsel %vm258, %v239, 0
  %v347 = vsel %vm258, %v240, 0
  %v350 = vsel %vm258, %v241, 0
  %v353 = vsel %vm258, %v242, 0
  %vm355 = vcmask 1041408
  %v357 = vsel %vm355, %v255, 0
  %359 = vmatprep.subr.bf16.mxu0 0
  %360 = vmatpush1.bf16.msra.mxu0 %v253
  %361 = vmatprep.subr.bf16.mxu0 0
  %362 = vmatpush1.bf16.msra.mxu0 %v254
  %363 = vmatprep.subr.bf16.mxu0 0
  %364 = vmatpush1.bf16.msra.mxu0 %v357
  %365 = vmatprep.subr.bf16.mxu0 0
  %366 = vmatpush1.bf16.msra.mxu0 0
  %367 = vmatprep.subr.bf16.mxu0 0
  %368 = vmatpush1.bf16.msra.mxu0 0
  %369 = vmatprep.subr.bf16.mxu0 0
  %370 = vmatpush1.bf16.msra.mxu0 0
  %371 = vmatprep.subr.bf16.mxu0 0
  %372 = vmatpush1.bf16.msra.mxu0 0
  %373 = vmatprep.subr.bf16.mxu0 0
  %374 = vmatpush1.bf16.msra.mxu0 0
  %375 = vmatprep.subr.bf16.mxu0 0
  %376 = vmatpush1.bf16.msra.mxu0 0
  %377 = vmatprep.subr.bf16.mxu0 0
  %378 = vmatpush1.bf16.msra.mxu0 0
  %379 = vmatprep.subr.bf16.mxu0 0
  %380 = vmatpush1.bf16.msra.mxu0 0
  %381 = vmatprep.subr.bf16.mxu0 0
  %382 = vmatpush1.bf16.msra.mxu0 0
  %383 = vmatprep.subr.bf16.mxu0 0
  %384 = vmatpush1.bf16.msra.mxu0 0
  %385 = vmatprep.subr.bf16.mxu0 0
  %386 = vmatpush1.bf16.msra.mxu0 0
  %387 = vmatprep.subr.bf16.mxu0 0
  %388 = vmatpush1.bf16.msra.mxu0 0
  %389 = vmatprep.subr.bf16.mxu0 0
  %390 = vmatpush1.bf16.msra.mxu0 0
  %391 = vmatprep.mubr.bf16.mxu0 0
  %392 = vmatmul.mubr.bf16.gmra.mrb[0].mxu0 %v260
  %v393 = vpop.f32.mrb[0].mxu0
  %v394 = vadd.f32 0.0, %v393
  %v395 = vpop.f32.mrb[0].mxu0
  %v396 = vpop.f32.mrb[0].mxu0
  %v397 = vadd.f32 0.0, %v396
  %v398 = vpop.f32.mrb[0].mxu0
  %399 = vmatprep.mubr.bf16.mxu0 0
  %400 = vmatmul.mubr.bf16.gmra.mrb[0].mxu0 %v263
  %v401 = vpop.f32.mrb[0].mxu0
  %v402 = vadd.f32 0.0, %v401
  %v403 = vpop.f32.mrb[0].mxu0
  %v404 = vpop.f32.mrb[0].mxu0
  %v405 = vadd.f32 0.0, %v404
  %v406 = vpop.f32.mrb[0].mxu0
  %407 = vmatprep.mubr.bf16.mxu0 0
  %408 = vmatmul.mubr.bf16.gmra.mrb[0].mxu0 %v266
  %v409 = vpop.f32.mrb[0].mxu0
  %v410 = vadd.f32 0.0, %v409
  %v411 = vpop.f32.mrb[0].mxu0
  %v412 = vpop.f32.mrb[0].mxu0
  %v413 = vadd.f32 0.0, %v412
  %v414 = vpop.f32.mrb[0].mxu0
  %415 = vmatprep.mubr.bf16.mxu0 0
  %416 = vmatmul.mubr.bf16.gmra.mrb[0].mxu0 %v269
  %v417 = vpop.f32.mrb[0].mxu0
  %v418 = vadd.f32 0.0, %v417
  %v419 = vpop.f32.mrb[0].mxu0
  %v420 = vpop.f32.mrb[0].mxu0
  %v421 = vadd.f32 0.0, %v420
  %v422 = vpop.f32.mrb[0].mxu0
  %423 = vmatprep.mubr.bf16.mxu0 0
  %424 = vmatmul.mubr.bf16.gmra.mrb[0].mxu0 %v272
  %v425 = vpop.f32.mrb[0].mxu0
  %v426 = vadd.f32 0.0, %v425
  %v427 = vpop.f32.mrb[0].mxu0
  %v428 = vpop.f32.mrb[0].mxu0
  %v429 = vadd.f32 0.0, %v428
  %v430 = vpop.f32.mrb[0].mxu0
  %431 = vmatprep.mubr.bf16.mxu0 0
  %432 = vmatmul.mubr.bf16.gmra.mrb[0].mxu0 %v275
  %v433 = vpop.f32.mrb[0].mxu0
  %v434 = vadd.f32 0.0, %v433
  %v435 = vpop.f32.mrb[0].mxu0
  %v436 = vpop.f32.mrb[0].mxu0
  %v437 = vadd.f32 0.0, %v436
  %v438 = vpop.f32.mrb[0].mxu0
  %439 = vmatprep.mubr.bf16.mxu0 0
  %440 = vmatmul.mubr.bf16.gmra.mrb[0].mxu0 %v278
  %v441 = vpop.f32.mrb[0].mxu0
  %v442 = vadd.f32 0.0, %v441
  %v443 = vpop.f32.mrb[0].mxu0
  %v444 = vpop.f32.mrb[0].mxu0
  %v445 = vadd.f32 0.0, %v444
  %v446 = vpop.f32.mrb[0].mxu0
  %447 = vmatprep.mubr.bf16.mxu0 0
  %448 = vmatmul.mubr.bf16.gmra.mrb[0].mxu0 %v281
  %v449 = vpop.f32.mrb[0].mxu0
  %v450 = vadd.f32 0.0, %v449
  %v451 = vpop.f32.mrb[0].mxu0
  %v452 = vpop.f32.mrb[0].mxu0
  %v453 = vadd.f32 0.0, %v452
  %v454 = vpop.f32.mrb[0].mxu0
  %455 = vmatprep.mubr.bf16.mxu0 0
  %456 = vmatmul.mubr.bf16.gmra.mrb[0].mxu0 %v284
  %v457 = vpop.f32.mrb[0].mxu0
  %v458 = vadd.f32 0.0, %v457
  %v459 = vpop.f32.mrb[0].mxu0
  %v460 = vpop.f32.mrb[0].mxu0
  %v461 = vadd.f32 0.0, %v460
  %v462 = vpop.f32.mrb[0].mxu0
  %463 = vmatprep.mubr.bf16.mxu0 0
  %464 = vmatmul.mubr.bf16.gmra.mrb[0].mxu0 %v287
  %v465 = vpop.f32.mrb[0].mxu0
  %v466 = vadd.f32 0.0, %v465
  %v467 = vpop.f32.mrb[0].mxu0
  %v468 = vpop.f32.mrb[0].mxu0
  %v469 = vadd.f32 0.0, %v468
  %v470 = vpop.f32.mrb[0].mxu0
  %471 = vmatprep.mubr.bf16.mxu0 0
  %472 = vmatmul.mubr.bf16.gmra.mrb[0].mxu0 %v290
  %v473 = vpop.f32.mrb[0].mxu0
  %v474 = vadd.f32 0.0, %v473
  %v475 = vpop.f32.mrb[0].mxu0
  %v476 = vpop.f32.mrb[0].mxu0
  %v477 = vadd.f32 0.0, %v476
  %v478 = vpop.f32.mrb[0].mxu0
  %479 = vmatprep.mubr.bf16.mxu0 0
  %480 = vmatmul.mubr.bf16.gmra.mrb[0].mxu0 %v293
  %v481 = vpop.f32.mrb[0].mxu0
  %v482 = vadd.f32 0.0, %v481
  %v483 = vpop.f32.mrb[0].mxu0
  %v484 = vpop.f32.mrb[0].mxu0
  %v485 = vadd.f32 0.0, %v484
  %v486 = vpop.f32.mrb[0].mxu0
  %487 = vmatprep.mubr.bf16.mxu0 0
  %488 = vmatmul.mubr.bf16.gmra.mrb[0].mxu0 %v296
  %v489 = vpop.f32.mrb[0].mxu0
  %v490 = vadd.f32 0.0, %v489
  %v491 = vpop.f32.mrb[0].mxu0
  %v492 = vpop.f32.mrb[0].mxu0
  %v493 = vadd.f32 0.0, %v492
  %v494 = vpop.f32.mrb[0].mxu0
  %495 = vmatprep.mubr.bf16.mxu0 0
  %496 = vmatmul.mubr.bf16.gmra.mrb[0].mxu0 %v299
  %v497 = vpop.f32.mrb[0].mxu0
  %v498 = vadd.f32 0.0, %v497
  %v499 = vpop.f32.mrb[0].mxu0
  %v500 = vpop.f32.mrb[0].mxu0
  %v501 = vadd.f32 0.0, %v500
  %v502 = vpop.f32.mrb[0].mxu0
  %503 = vmatprep.mubr.bf16.mxu0 0
  %504 = vmatmul.mubr.bf16.gmra.mrb[0].mxu0 %v302
  %v505 = vpop.f32.mrb[0].mxu0
  %v506 = vadd.f32 0.0, %v505
  %v507 = vpop.f32.mrb[0].mxu0
  %v508 = vpop.f32.mrb[0].mxu0
  %v509 = vadd.f32 0.0, %v508
  %v510 = vpop.f32.mrb[0].mxu0
  %511 = vmatprep.mubr.bf16.mxu0 0
  %512 = vmatmul.mubr.bf16.gmra.mrb[0].mxu0 %v305
  %v513 = vpop.f32.mrb[0].mxu0
  %v514 = vadd.f32 0.0, %v513
  %v515 = vpop.f32.mrb[0].mxu0
  %v516 = vpop.f32.mrb[0].mxu0
  %v517 = vadd.f32 0.0, %v516
  %v518 = vpop.f32.mrb[0].mxu0
  %519 = vmatprep.mubr.bf16.mxu0 0
  %520 = vmatmul.mubr.bf16.gmra.mrb[0].mxu0 %v308
  %v521 = vpop.f32.mrb[0].mxu0
  %v522 = vadd.f32 0.0, %v521
  %v523 = vpop.f32.mrb[0].mxu0
  %v524 = vpop.f32.mrb[0].mxu0
  %v525 = vadd.f32 0.0, %v524
  %v526 = vpop.f32.mrb[0].mxu0
  %527 = vmatprep.mubr.bf16.mxu0 0
  %528 = vmatmul.mubr.bf16.gmra.mrb[0].mxu0 %v311
  %v529 = vpop.f32.mrb[0].mxu0
  %v530 = vadd.f32 0.0, %v529
  %v531 = vpop.f32.mrb[0].mxu0
  %v532 = vpop.f32.mrb[0].mxu0
  %v533 = vadd.f32 0.0, %v532
  %v534 = vpop.f32.mrb[0].mxu0
  %535 = vmatprep.mubr.bf16.mxu0 0
  %536 = vmatmul.mubr.bf16.gmra.mrb[0].mxu0 %v314
  %v537 = vpop.f32.mrb[0].mxu0
  %v538 = vadd.f32 0.0, %v537
  %v539 = vpop.f32.mrb[0].mxu0
  %v540 = vpop.f32.mrb[0].mxu0
  %v541 = vadd.f32 0.0, %v540
  %v542 = vpop.f32.mrb[0].mxu0
  %543 = vmatprep.mubr.bf16.mxu0 0
  %544 = vmatmul.mubr.bf16.gmra.mrb[0].mxu0 %v317
  %v545 = vpop.f32.mrb[0].mxu0
  %v546 = vadd.f32 0.0, %v545
  %v547 = vpop.f32.mrb[0].mxu0
  %v548 = vpop.f32.mrb[0].mxu0
  %v549 = vadd.f32 0.0, %v548
  %v550 = vpop.f32.mrb[0].mxu0
  %551 = vmatprep.mubr.bf16.mxu0 0
  %552 = vmatmul.mubr.bf16.gmra.mrb[0].mxu0 %v320
  %v553 = vpop.f32.mrb[0].mxu0
  %v554 = vadd.f32 0.0, %v553
  %v555 = vpop.f32.mrb[0].mxu0
  %v556 = vpop.f32.mrb[0].mxu0
  %v557 = vadd.f32 0.0, %v556
  %v558 = vpop.f32.mrb[0].mxu0
  %559 = vmatprep.mubr.bf16.mxu0 0
  %560 = vmatmul.mubr.bf16.gmra.mrb[0].mxu0 %v323
  %v561 = vpop.f32.mrb[0].mxu0
  %v562 = vadd.f32 0.0, %v561
  %v563 = vpop.f32.mrb[0].mxu0
  %v564 = vpop.f32.mrb[0].mxu0
  %v565 = vadd.f32 0.0, %v564
  %v566 = vpop.f32.mrb[0].mxu0
  %567 = vmatprep.mubr.bf16.mxu0 0
  %568 = vmatmul.mubr.bf16.gmra.mrb[0].mxu0 %v326
  %v569 = vpop.f32.mrb[0].mxu0
  %v570 = vadd.f32 0.0, %v569
  %v571 = vpop.f32.mrb[0].mxu0
  %v572 = vpop.f32.mrb[0].mxu0
  %v573 = vadd.f32 0.0, %v572
  %v574 = vpop.f32.mrb[0].mxu0
  %575 = vmatprep.mubr.bf16.mxu0 0
  %576 = vmatmul.mubr.bf16.gmra.mrb[0].mxu0 %v329
  %v577 = vpop.f32.mrb[0].mxu0
  %v578 = vadd.f32 0.0, %v577
  %v579 = vpop.f32.mrb[0].mxu0
  %v580 = vpop.f32.mrb[0].mxu0
  %v581 = vadd.f32 0.0, %v580
  %v582 = vpop.f32.mrb[0].mxu0
  %583 = vmatprep.mubr.bf16.mxu0 0
  %584 = vmatmul.mubr.bf16.gmra.mrb[0].mxu0 %v332
  %v585 = vpop.f32.mrb[0].mxu0
  %v586 = vadd.f32 0.0, %v585
  %v587 = vpop.f32.mrb[0].mxu0
  %v588 = vpop.f32.mrb[0].mxu0
  %v589 = vadd.f32 0.0, %v588
  %v590 = vpop.f32.mrb[0].mxu0
  %591 = vmatprep.mubr.bf16.mxu0 0
  %592 = vmatmul.mubr.bf16.gmra.mrb[0].mxu0 %v335
  %v593 = vpop.f32.mrb[0].mxu0
  %v594 = vadd.f32 0.0, %v593
  %v595 = vpop.f32.mrb[0].mxu0
  %v596 = vpop.f32.mrb[0].mxu0
  %v597 = vadd.f32 0.0, %v596
  %v598 = vpop.f32.mrb[0].mxu0
  %599 = vmatprep.mubr.bf16.mxu0 0
  %600 = vmatmul.mubr.bf16.gmra.mrb[0].mxu0 %v338
  %v601 = vpop.f32.mrb[0].mxu0
  %v602 = vadd.f32 0.0, %v601
  %v603 = vpop.f32.mrb[0].mxu0
  %v604 = vpop.f32.mrb[0].mxu0
  %v605 = vadd.f32 0.0, %v604
  %v606 = vpop.f32.mrb[0].mxu0
  %607 = vmatprep.mubr.bf16.mxu0 0
  %608 = vmatmul.mubr.bf16.gmra.mrb[0].mxu0 %v341
  %v609 = vpop.f32.mrb[0].mxu0
  %v610 = vadd.f32 0.0, %v609
  %v611 = vpop.f32.mrb[0].mxu0
  %v612 = vpop.f32.mrb[0].mxu0
  %v613 = vadd.f32 0.0, %v612
  %v614 = vpop.f32.mrb[0].mxu0
  %615 = vmatprep.mubr.bf16.mxu0 0
  %616 = vmatmul.mubr.bf16.gmra.mrb[0].mxu0 %v344
  %v617 = vpop.f32.mrb[0].mxu0
  %v618 = vadd.f32 0.0, %v617
  %v619 = vpop.f32.mrb[0].mxu0
  %v620 = vpop.f32.mrb[0].mxu0
  %v621 = vadd.f32 0.0, %v620
  %v622 = vpop.f32.mrb[0].mxu0
  %623 = vmatprep.mubr.bf16.mxu0 0
  %624 = vmatmul.mubr.bf16.gmra.mrb[0].mxu0 %v347
  %v625 = vpop.f32.mrb[0].mxu0
  %v626 = vadd.f32 0.0, %v625
  %v627 = vpop.f32.mrb[0].mxu0
  %v628 = vpop.f32.mrb[0].mxu0
  %v629 = vadd.f32 0.0, %v628
  %v630 = vpop.f32.mrb[0].mxu0
  %631 = vmatprep.mubr.bf16.mxu0 0
  %632 = vmatmul.mubr.bf16.gmra.mrb[0].mxu0 %v350
  %v633 = vpop.f32.mrb[0].mxu0
  %v634 = vadd.f32 0.0, %v633
  %v635 = vpop.f32.mrb[0].mxu0
  %v636 = vpop.f32.mrb[0].mxu0
  %v637 = vadd.f32 0.0, %v636
  %v638 = vpop.f32.mrb[0].mxu0
  %639 = vmatprep.mubr.bf16.mxu0 0
  %640 = vmatmul.mubr.bf16.gmra.mrb[0].mxu0 %v353
  %v641 = vpop.f32.mrb[0].mxu0
  %v642 = vadd.f32 0.0, %v641
  %v643 = vpop.f32.mrb[0].mxu0
  %v644 = vpop.f32.mrb[0].mxu0
  %v645 = vadd.f32 0.0, %v644
  %v646 = vpop.f32.mrb[0].mxu0
  %647 = vdwg.mxu0
  %v648 = vpack.c.bf16 %v397, %v394
  %v649 = vpack.c.bf16 %v405, %v402
  %v650 = vpack.c.bf16 %v413, %v410
  %v651 = vpack.c.bf16 %v421, %v418
  %v652 = vpack.c.bf16 %v429, %v426
  %v653 = vpack.c.bf16 %v437, %v434
  %v654 = vpack.c.bf16 %v445, %v442
  %v655 = vpack.c.bf16 %v453, %v450
  %v656 = vpack.c.bf16 %v461, %v458
  %v657 = vpack.c.bf16 %v469, %v466
  %v658 = vpack.c.bf16 %v477, %v474
  %v659 = vpack.c.bf16 %v485, %v482
  %v660 = vpack.c.bf16 %v493, %v490
  %v661 = vpack.c.bf16 %v501, %v498
  %v662 = vpack.c.bf16 %v509, %v506
  %v663 = vpack.c.bf16 %v517, %v514
  %v664 = vpack.c.bf16 %v525, %v522
  %v665 = vpack.c.bf16 %v533, %v530
  %v666 = vpack.c.bf16 %v541, %v538
  %v667 = vpack.c.bf16 %v549, %v546
  %v668 = vpack.c.bf16 %v557, %v554
  %v669 = vpack.c.bf16 %v565, %v562
  %v670 = vpack.c.bf16 %v573, %v570
  %v671 = vpack.c.bf16 %v581, %v578
  %v672 = vpack.c.bf16 %v589, %v586
  %v673 = vpack.c.bf16 %v597, %v594
  %v674 = vpack.c.bf16 %v605, %v602
  %v675 = vpack.c.bf16 %v613, %v610
  %v676 = vpack.c.bf16 %v621, %v618
  %v677 = vpack.c.bf16 %v629, %v626
  %v678 = vpack.c.bf16 %v637, %v634
  %v679 = vpack.c.bf16 %v645, %v642
  %v712 = vunpack.c.l.b16 %v648
  %v713 = vunpack.c.h.b16 %v648
  %v714 = vunpack.c.l.b16 %v649
  %v715 = vunpack.c.h.b16 %v649
  %v716 = vunpack.c.l.b16 %v650
  %v717 = vunpack.c.h.b16 %v650
  %v718 = vunpack.c.l.b16 %v651
  %v719 = vunpack.c.h.b16 %v651
  %v720 = vunpack.c.l.b16 %v652
  %v721 = vunpack.c.h.b16 %v652
  %v722 = vunpack.c.l.b16 %v653
  %v723 = vunpack.c.h.b16 %v653
  %v724 = vunpack.c.l.b16 %v654
  %v725 = vunpack.c.h.b16 %v654
  %v726 = vunpack.c.l.b16 %v655
  %v727 = vunpack.c.h.b16 %v655
  %v728 = vunpack.c.l.b16 %v656
  %v729 = vunpack.c.h.b16 %v656
  %v730 = vunpack.c.l.b16 %v657
  %v731 = vunpack.c.h.b16 %v657
  %v732 = vunpack.c.l.b16 %v658
  %v733 = vunpack.c.h.b16 %v658
  %v734 = vunpack.c.l.b16 %v659
  %v735 = vunpack.c.h.b16 %v659
  %v736 = vunpack.c.l.b16 %v660
  %v737 = vunpack.c.h.b16 %v660
  %v738 = vunpack.c.l.b16 %v661
  %v739 = vunpack.c.h.b16 %v661
  %v740 = vunpack.c.l.b16 %v662
  %v741 = vunpack.c.h.b16 %v662
  %v742 = vunpack.c.l.b16 %v663
  %v743 = vunpack.c.h.b16 %v663
  %v744 = vunpack.c.l.b16 %v664
  %v745 = vunpack.c.h.b16 %v664
  %v746 = vunpack.c.l.b16 %v665
  %v747 = vunpack.c.h.b16 %v665
  %v748 = vunpack.c.l.b16 %v666
  %v749 = vunpack.c.h.b16 %v666
  %v750 = vunpack.c.l.b16 %v667
  %v751 = vunpack.c.h.b16 %v667
  %v752 = vunpack.c.l.b16 %v668
  %v753 = vunpack.c.h.b16 %v668
  %v754 = vunpack.c.l.b16 %v669
  %v755 = vunpack.c.h.b16 %v669
  %v756 = vunpack.c.l.b16 %v670
  %v757 = vunpack.c.h.b16 %v670
  %v758 = vunpack.c.l.b16 %v671
  %v759 = vunpack.c.h.b16 %v671
  %v760 = vunpack.c.l.b16 %v672
  %v761 = vunpack.c.h.b16 %v672
  %v762 = vunpack.c.l.b16 %v673
  %v763 = vunpack.c.h.b16 %v673
  %v764 = vunpack.c.l.b16 %v674
  %v765 = vunpack.c.h.b16 %v674
  %v766 = vunpack.c.l.b16 %v675
  %v767 = vunpack.c.h.b16 %v675
  %v768 = vunpack.c.l.b16 %v676
  %v769 = vunpack.c.h.b16 %v676
  %v770 = vunpack.c.l.b16 %v677
  %v771 = vunpack.c.h.b16 %v677
  %v772 = vunpack.c.l.b16 %v678
  %v773 = vunpack.c.h.b16 %v678
  %v774 = vunpack.c.l.b16 %v679
  %v775 = vunpack.c.h.b16 %v679
  %v776 = vpack.c.b16 %v712, %v712
  %v777 = vpack.c.b16 %v713, %v713
  %v778 = vpack.c.b16 %v714, %v714
  %v779 = vpack.c.b16 %v715, %v715
  %v780 = vpack.c.b16 %v716, %v716
  %v781 = vpack.c.b16 %v717, %v717
  %v782 = vpack.c.b16 %v718, %v718
  %v783 = vpack.c.b16 %v719, %v719
  %v784 = vpack.c.b16 %v720, %v720
  %v785 = vpack.c.b16 %v721, %v721
  %v786 = vpack.c.b16 %v722, %v722
  %v787 = vpack.c.b16 %v723, %v723
  %v788 = vpack.c.b16 %v724, %v724
  %v789 = vpack.c.b16 %v725, %v725
  %v790 = vpack.c.b16 %v726, %v726
  %v791 = vpack.c.b16 %v727, %v727
  %v792 = vpack.c.b16 %v728, %v728
  %v793 = vpack.c.b16 %v729, %v729
  %v794 = vpack.c.b16 %v730, %v730
  %v795 = vpack.c.b16 %v731, %v731
  %v796 = vpack.c.b16 %v732, %v732
  %v797 = vpack.c.b16 %v733, %v733
  %v798 = vpack.c.b16 %v734, %v734
  %v799 = vpack.c.b16 %v735, %v735
  %v800 = vpack.c.b16 %v736, %v736
  %v801 = vpack.c.b16 %v737, %v737
  %v802 = vpack.c.b16 %v738, %v738
  %v803 = vpack.c.b16 %v739, %v739
  %v804 = vpack.c.b16 %v740, %v740
  %v805 = vpack.c.b16 %v741, %v741
  %v806 = vpack.c.b16 %v742, %v742
  %v807 = vpack.c.b16 %v743, %v743
  %v808 = vpack.c.b16 %v744, %v744
  %v809 = vpack.c.b16 %v745, %v745
  %v810 = vpack.c.b16 %v746, %v746
  %v811 = vpack.c.b16 %v747, %v747
  %v812 = vpack.c.b16 %v748, %v748
  %v813 = vpack.c.b16 %v749, %v749
  %v814 = vpack.c.b16 %v750, %v750
  %v815 = vpack.c.b16 %v751, %v751
  %v816 = vpack.c.b16 %v752, %v752
  %v817 = vpack.c.b16 %v753, %v753
  %v818 = vpack.c.b16 %v754, %v754
  %v819 = vpack.c.b16 %v755, %v755
  %v820 = vpack.c.b16 %v756, %v756
  %v821 = vpack.c.b16 %v757, %v757
  %v822 = vpack.c.b16 %v758, %v758
  %v823 = vpack.c.b16 %v759, %v759
  %v824 = vpack.c.b16 %v760, %v760
  %v825 = vpack.c.b16 %v761, %v761
  %v826 = vpack.c.b16 %v762, %v762
  %v827 = vpack.c.b16 %v763, %v763
  %v828 = vpack.c.b16 %v764, %v764
  %v829 = vpack.c.b16 %v765, %v765
  %v830 = vpack.c.b16 %v766, %v766
  %v831 = vpack.c.b16 %v767, %v767
  %v832 = vpack.c.b16 %v768, %v768
  %v833 = vpack.c.b16 %v769, %v769
  %v834 = vpack.c.b16 %v770, %v770
  %v835 = vpack.c.b16 %v771, %v771
  %v836 = vpack.c.b16 %v772, %v772
  %v837 = vpack.c.b16 %v773, %v773
  %v838 = vpack.c.b16 %v774, %v774
  %v839 = vpack.c.b16 %v775, %v775
  %vm904 = vcmask 60416
  %905 = vst.msk [vmem:[%s2] sm:$0xf] %vm904, %v776
  %906 = vst.msk [vmem:[%s2 + $0x4] sm:$0xf] %vm904, %v777
  %907 = vst.msk [vmem:[%s2 + $0x8] sm:$0xf] %vm904, %v778
  %908 = vst.msk [vmem:[%s2 + $0xc] sm:$0xf] %vm904, %v779
  %909 = vst.msk [vmem:[%s2 + $0x10] sm:$0xf] %vm904, %v780
  %910 = vst.msk [vmem:[%s2 + $0x14] sm:$0xf] %vm904, %v781
  %911 = vst.msk [vmem:[%s2 + $0x18] sm:$0xf] %vm904, %v782
  %912 = vst.msk [vmem:[%s2 + $0x1c] sm:$0xf] %vm904, %v783
  %913 = vst.msk [vmem:[%s2 + $0x20] sm:$0xf] %vm904, %v784
  %914 = vst.msk [vmem:[%s2 + $0x24] sm:$0xf] %vm904, %v785
  %915 = vst.msk [vmem:[%s2 + $0x28] sm:$0xf] %vm904, %v786
  %916 = vst.msk [vmem:[%s2 + $0x2c] sm:$0xf] %vm904, %v787
  %917 = vst.msk [vmem:[%s2 + $0x30] sm:$0xf] %vm904, %v788
  %918 = vst.msk [vmem:[%s2 + $0x34] sm:$0xf] %vm904, %v789
  %919 = vst.msk [vmem:[%s2 + $0x38] sm:$0xf] %vm904, %v790
  %920 = vst.msk [vmem:[%s2 + $0x3c] sm:$0xf] %vm904, %v791
  %921 = vst.msk [vmem:[%s2 + $0x40] sm:$0xf] %vm904, %v792
  %922 = vst.msk [vmem:[%s2 + $0x44] sm:$0xf] %vm904, %v793
  %923 = vst.msk [vmem:[%s2 + $0x48] sm:$0xf] %vm904, %v794
  %924 = vst.msk [vmem:[%s2 + $0x4c] sm:$0xf] %vm904, %v795
  %925 = vst.msk [vmem:[%s2 + $0x50] sm:$0xf] %vm904, %v796
  %926 = vst.msk [vmem:[%s2 + $0x54] sm:$0xf] %vm904, %v797
  %927 = vst.msk [vmem:[%s2 + $0x58] sm:$0xf] %vm904, %v798
  %928 = vst.msk [vmem:[%s2 + $0x5c] sm:$0xf] %vm904, %v799
  %929 = vst.msk [vmem:[%s2 + $0x60] sm:$0xf] %vm904, %v800
  %930 = vst.msk [vmem:[%s2 + $0x64] sm:$0xf] %vm904, %v801
  %931 = vst.msk [vmem:[%s2 + $0x68] sm:$0xf] %vm904, %v802
  %932 = vst.msk [vmem:[%s2 + $0x6c] sm:$0xf] %vm904, %v803
  %933 = vst.msk [vmem:[%s2 + $0x70] sm:$0xf] %vm904, %v804
  %934 = vst.msk [vmem:[%s2 + $0x74] sm:$0xf] %vm904, %v805
  %935 = vst.msk [vmem:[%s2 + $0x78] sm:$0xf] %vm904, %v806
  %936 = vst.msk [vmem:[%s2 + $0x7c] sm:$0xf] %vm904, %v807
  %937 = vst.msk [vmem:[%s2 + $0x80] sm:$0xf] %vm904, %v808
  %938 = vst.msk [vmem:[%s2 + $0x84] sm:$0xf] %vm904, %v809
  %939 = vst.msk [vmem:[%s2 + $0x88] sm:$0xf] %vm904, %v810
  %940 = vst.msk [vmem:[%s2 + $0x8c] sm:$0xf] %vm904, %v811
  %941 = vst.msk [vmem:[%s2 + $0x90] sm:$0xf] %vm904, %v812
  %942 = vst.msk [vmem:[%s2 + $0x94] sm:$0xf] %vm904, %v813
  %943 = vst.msk [vmem:[%s2 + $0x98] sm:$0xf] %vm904, %v814
  %944 = vst.msk [vmem:[%s2 + $0x9c] sm:$0xf] %vm904, %v815
  %945 = vst.msk [vmem:[%s2 + $0xa0] sm:$0xf] %vm904, %v816
  %946 = vst.msk [vmem:[%s2 + $0xa4] sm:$0xf] %vm904, %v817
  %947 = vst.msk [vmem:[%s2 + $0xa8] sm:$0xf] %vm904, %v818
  %948 = vst.msk [vmem:[%s2 + $0xac] sm:$0xf] %vm904, %v819
  %949 = vst.msk [vmem:[%s2 + $0xb0] sm:$0xf] %vm904, %v820
  %950 = vst.msk [vmem:[%s2 + $0xb4] sm:$0xf] %vm904, %v821
  %951 = vst.msk [vmem:[%s2 + $0xb8] sm:$0xf] %vm904, %v822
  %952 = vst.msk [vmem:[%s2 + $0xbc] sm:$0xf] %vm904, %v823
  %953 = vst.msk [vmem:[%s2 + $0xc0] sm:$0xf] %vm904, %v824
  %954 = vst.msk [vmem:[%s2 + $0xc4] sm:$0xf] %vm904, %v825
  %955 = vst.msk [vmem:[%s2 + $0xc8] sm:$0xf] %vm904, %v826
  %956 = vst.msk [vmem:[%s2 + $0xcc] sm:$0xf] %vm904, %v827
  %957 = vst.msk [vmem:[%s2 + $0xd0] sm:$0xf] %vm904, %v828
  %958 = vst.msk [vmem:[%s2 + $0xd4] sm:$0xf] %vm904, %v829
  %959 = vst.msk [vmem:[%s2 + $0xd8] sm:$0xf] %vm904, %v830
  %960 = vst.msk [vmem:[%s2 + $0xdc] sm:$0xf] %vm904, %v831
  %961 = vst.msk [vmem:[%s2 + $0xe0] sm:$0xf] %vm904, %v832
  %962 = vst.msk [vmem:[%s2 + $0xe4] sm:$0xf] %vm904, %v833
  %963 = vst.msk [vmem:[%s2 + $0xe8] sm:$0xf] %vm904, %v834
  %964 = vst.msk [vmem:[%s2 + $0xec] sm:$0xf] %vm904, %v835
  %965 = vst.msk [vmem:[%s2 + $0xf0] sm:$0xf] %vm904, %v836
  %966 = vst.msk [vmem:[%s2 + $0xf4] sm:$0xf] %vm904, %v837
  %967 = vst.msk [vmem:[%s2 + $0xf8] sm:$0xf] %vm904, %v838
  %968 = vst.msk [vmem:[%s2 + $0xfc] sm:$0xf] %vm904, %v839
  %vm969 = vcmask 64512
  %v970 = vsel %vm969, %v394, 0.0
  %v971 = vsel %vm969, %v397, 0.0
  %v972 = vadd.f32 %v970, %v971
  %v973 = vsel %vm969, %v402, 0.0
  %v974 = vadd.f32 %v972, %v973
  %v975 = vsel %vm969, %v405, 0.0
  %v976 = vadd.f32 %v974, %v975
  %v977 = vsel %vm969, %v410, 0.0
  %v978 = vadd.f32 %v976, %v977
  %v979 = vsel %vm969, %v413, 0.0
  %v980 = vadd.f32 %v978, %v979
  %v981 = vsel %vm969, %v418, 0.0
  %v982 = vadd.f32 %v980, %v981
  %v983 = vsel %vm969, %v421, 0.0
  %v984 = vadd.f32 %v982, %v983
  %v985 = vsel %vm969, %v426, 0.0
  %v986 = vadd.f32 %v984, %v985
  %v987 = vsel %vm969, %v429, 0.0
  %v988 = vadd.f32 %v986, %v987
  %v989 = vsel %vm969, %v434, 0.0
  %v990 = vadd.f32 %v988, %v989
  %v991 = vsel %vm969, %v437, 0.0
  %v992 = vadd.f32 %v990, %v991
  %v993 = vsel %vm969, %v442, 0.0
  %v994 = vadd.f32 %v992, %v993
  %v995 = vsel %vm969, %v445, 0.0
  %v996 = vadd.f32 %v994, %v995
  %v997 = vsel %vm969, %v450, 0.0
  %v998 = vadd.f32 %v996, %v997
  %v999 = vsel %vm969, %v453, 0.0
  %v1000 = vadd.f32 %v998, %v999
  %v1001 = vsel %vm969, %v458, 0.0
  %v1002 = vadd.f32 %v1000, %v1001
  %v1003 = vsel %vm969, %v461, 0.0
  %v1004 = vadd.f32 %v1002, %v1003
  %v1005 = vsel %vm969, %v466, 0.0
  %v1006 = vadd.f32 %v1004, %v1005
  %v1007 = vsel %vm969, %v469, 0.0
  %v1008 = vadd.f32 %v1006, %v1007
  %v1009 = vsel %vm969, %v474, 0.0
  %v1010 = vadd.f32 %v1008, %v1009
  %v1011 = vsel %vm969, %v477, 0.0
  %v1012 = vadd.f32 %v1010, %v1011
  %v1013 = vsel %vm969, %v482, 0.0
  %v1014 = vadd.f32 %v1012, %v1013
  %v1015 = vsel %vm969, %v485, 0.0
  %v1016 = vadd.f32 %v1014, %v1015
  %v1017 = vsel %vm969, %v490, 0.0
  %v1018 = vadd.f32 %v1016, %v1017
  %v1019 = vsel %vm969, %v493, 0.0
  %v1020 = vadd.f32 %v1018, %v1019
  %v1021 = vsel %vm969, %v498, 0.0
  %v1022 = vadd.f32 %v1020, %v1021
  %v1023 = vsel %vm969, %v501, 0.0
  %v1024 = vadd.f32 %v1022, %v1023
  %v1025 = vsel %vm969, %v506, 0.0
  %v1026 = vadd.f32 %v1024, %v1025
  %v1027 = vsel %vm969, %v509, 0.0
  %v1028 = vadd.f32 %v1026, %v1027
  %v1029 = vsel %vm969, %v514, 0.0
  %v1030 = vadd.f32 %v1028, %v1029
  %v1031 = vsel %vm969, %v517, 0.0
  %v1032 = vadd.f32 %v1030, %v1031
  %v1033 = vsel %vm969, %v522, 0.0
  %v1034 = vadd.f32 %v1032, %v1033
  %v1035 = vsel %vm969, %v525, 0.0
  %v1036 = vadd.f32 %v1034, %v1035
  %v1037 = vsel %vm969, %v530, 0.0
  %v1038 = vadd.f32 %v1036, %v1037
  %v1039 = vsel %vm969, %v533, 0.0
  %v1040 = vadd.f32 %v1038, %v1039
  %v1041 = vsel %vm969, %v538, 0.0
  %v1042 = vadd.f32 %v1040, %v1041
  %v1043 = vsel %vm969, %v541, 0.0
  %v1044 = vadd.f32 %v1042, %v1043
  %v1045 = vsel %vm969, %v546, 0.0
  %v1046 = vadd.f32 %v1044, %v1045
  %v1047 = vsel %vm969, %v549, 0.0
  %v1048 = vadd.f32 %v1046, %v1047
  %v1049 = vsel %vm969, %v554, 0.0
  %v1050 = vadd.f32 %v1048, %v1049
  %v1051 = vsel %vm969, %v557, 0.0
  %v1052 = vadd.f32 %v1050, %v1051
  %v1053 = vsel %vm969, %v562, 0.0
  %v1054 = vadd.f32 %v1052, %v1053
  %v1055 = vsel %vm969, %v565, 0.0
  %v1056 = vadd.f32 %v1054, %v1055
  %v1057 = vsel %vm969, %v570, 0.0
  %v1058 = vadd.f32 %v1056, %v1057
  %v1059 = vsel %vm969, %v573, 0.0
  %v1060 = vadd.f32 %v1058, %v1059
  %v1061 = vsel %vm969, %v578, 0.0
  %v1062 = vadd.f32 %v1060, %v1061
  %v1063 = vsel %vm969, %v581, 0.0
  %v1064 = vadd.f32 %v1062, %v1063
  %v1065 = vsel %vm969, %v586, 0.0
  %v1066 = vadd.f32 %v1064, %v1065
  %v1067 = vsel %vm969, %v589, 0.0
  %v1068 = vadd.f32 %v1066, %v1067
  %v1069 = vsel %vm969, %v594, 0.0
  %v1070 = vadd.f32 %v1068, %v1069
  %v1071 = vsel %vm969, %v597, 0.0
  %v1072 = vadd.f32 %v1070, %v1071
  %v1073 = vsel %vm969, %v602, 0.0
  %v1074 = vadd.f32 %v1072, %v1073
  %v1075 = vsel %vm969, %v605, 0.0
  %v1076 = vadd.f32 %v1074, %v1075
  %v1077 = vsel %vm969, %v610, 0.0
  %v1078 = vadd.f32 %v1076, %v1077
  %v1079 = vsel %vm969, %v613, 0.0
  %v1080 = vadd.f32 %v1078, %v1079
  %v1081 = vsel %vm969, %v618, 0.0
  %v1082 = vadd.f32 %v1080, %v1081
  %v1083 = vsel %vm969, %v621, 0.0
  %v1084 = vadd.f32 %v1082, %v1083
  %v1085 = vsel %vm969, %v626, 0.0
  %v1086 = vadd.f32 %v1084, %v1085
  %v1087 = vsel %vm969, %v629, 0.0
  %v1088 = vadd.f32 %v1086, %v1087
  %v1089 = vsel %vm969, %v634, 0.0
  %v1090 = vadd.f32 %v1088, %v1089
  %v1091 = vsel %vm969, %v637, 0.0
  %v1092 = vadd.f32 %v1090, %v1091
  %v1093 = vsel %vm969, %v642, 0.0
  %v1094 = vadd.f32 %v1092, %v1093
  %v1095 = vsel %vm969, %v645, 0.0
  %v1096 = vadd.f32 %v1094, %v1095
  %1097 = vst.msk [vmem:[%s3] sm:$0xff] %vm969, %v1096
  %v1098 = vmul.f32 %v394, %v394
  %v1099 = vmul.f32 %v397, %v397
  %v1100 = vmul.f32 %v402, %v402
  %v1101 = vmul.f32 %v405, %v405
  %v1102 = vmul.f32 %v410, %v410
  %v1103 = vmul.f32 %v413, %v413
  %v1104 = vmul.f32 %v418, %v418
  %v1105 = vmul.f32 %v421, %v421
  %v1106 = vmul.f32 %v426, %v426
  %v1107 = vmul.f32 %v429, %v429
  %v1108 = vmul.f32 %v434, %v434
  %v1109 = vmul.f32 %v437, %v437
  %v1110 = vmul.f32 %v442, %v442
  %v1111 = vmul.f32 %v445, %v445
  %v1112 = vmul.f32 %v450, %v450
  %v1113 = vmul.f32 %v453, %v453
  %v1114 = vmul.f32 %v458, %v458
  %v1115 = vmul.f32 %v461, %v461
  %v1116 = vmul.f32 %v466, %v466
  %v1117 = vmul.f32 %v469, %v469
  %v1118 = vmul.f32 %v474, %v474
  %v1119 = vmul.f32 %v477, %v477
  %v1120 = vmul.f32 %v482, %v482
  %v1121 = vmul.f32 %v485, %v485
  %v1122 = vmul.f32 %v490, %v490
  %v1123 = vmul.f32 %v493, %v493
  %v1124 = vmul.f32 %v498, %v498
  %v1125 = vmul.f32 %v501, %v501
  %v1126 = vmul.f32 %v506, %v506
  %v1127 = vmul.f32 %v509, %v509
  %v1128 = vmul.f32 %v514, %v514
  %v1129 = vmul.f32 %v517, %v517
  %v1130 = vmul.f32 %v522, %v522
  %v1131 = vmul.f32 %v525, %v525
  %v1132 = vmul.f32 %v530, %v530
  %v1133 = vmul.f32 %v533, %v533
  %v1134 = vmul.f32 %v538, %v538
  %v1135 = vmul.f32 %v541, %v541
  %v1136 = vmul.f32 %v546, %v546
  %v1137 = vmul.f32 %v549, %v549
  %v1138 = vmul.f32 %v554, %v554
  %v1139 = vmul.f32 %v557, %v557
  %v1140 = vmul.f32 %v562, %v562
  %v1141 = vmul.f32 %v565, %v565
  %v1142 = vmul.f32 %v570, %v570
  %v1143 = vmul.f32 %v573, %v573
  %v1144 = vmul.f32 %v578, %v578
  %v1145 = vmul.f32 %v581, %v581
  %v1146 = vmul.f32 %v586, %v586
  %v1147 = vmul.f32 %v589, %v589
  %v1148 = vmul.f32 %v594, %v594
  %v1149 = vmul.f32 %v597, %v597
  %v1150 = vmul.f32 %v602, %v602
  %v1151 = vmul.f32 %v605, %v605
  %v1152 = vmul.f32 %v610, %v610
  %v1153 = vmul.f32 %v613, %v613
  %v1154 = vmul.f32 %v618, %v618
  %v1155 = vmul.f32 %v621, %v621
  %v1156 = vmul.f32 %v626, %v626
  %v1157 = vmul.f32 %v629, %v629
  %v1158 = vmul.f32 %v634, %v634
  %v1159 = vmul.f32 %v637, %v637
  %v1160 = vmul.f32 %v642, %v642
  %v1161 = vmul.f32 %v645, %v645
  %v1162 = vsel %vm969, %v1098, 0.0
  %v1163 = vsel %vm969, %v1099, 0.0
  %v1164 = vadd.f32 %v1162, %v1163
  %v1165 = vsel %vm969, %v1100, 0.0
  %v1166 = vadd.f32 %v1164, %v1165
  %v1167 = vsel %vm969, %v1101, 0.0
  %v1168 = vadd.f32 %v1166, %v1167
  %v1169 = vsel %vm969, %v1102, 0.0
  %v1170 = vadd.f32 %v1168, %v1169
  %v1171 = vsel %vm969, %v1103, 0.0
  %v1172 = vadd.f32 %v1170, %v1171
  %v1173 = vsel %vm969, %v1104, 0.0
  %v1174 = vadd.f32 %v1172, %v1173
  %v1175 = vsel %vm969, %v1105, 0.0
  %v1176 = vadd.f32 %v1174, %v1175
  %v1177 = vsel %vm969, %v1106, 0.0
  %v1178 = vadd.f32 %v1176, %v1177
  %v1179 = vsel %vm969, %v1107, 0.0
  %v1180 = vadd.f32 %v1178, %v1179
  %v1181 = vsel %vm969, %v1108, 0.0
  %v1182 = vadd.f32 %v1180, %v1181
  %v1183 = vsel %vm969, %v1109, 0.0
  %v1184 = vadd.f32 %v1182, %v1183
  %v1185 = vsel %vm969, %v1110, 0.0
  %v1186 = vadd.f32 %v1184, %v1185
  %v1187 = vsel %vm969, %v1111, 0.0
  %v1188 = vadd.f32 %v1186, %v1187
  %v1189 = vsel %vm969, %v1112, 0.0
  %v1190 = vadd.f32 %v1188, %v1189
  %v1191 = vsel %vm969, %v1113, 0.0
  %v1192 = vadd.f32 %v1190, %v1191
  %v1193 = vsel %vm969, %v1114, 0.0
  %v1194 = vadd.f32 %v1192, %v1193
  %v1195 = vsel %vm969, %v1115, 0.0
  %v1196 = vadd.f32 %v1194, %v1195
  %v1197 = vsel %vm969, %v1116, 0.0
  %v1198 = vadd.f32 %v1196, %v1197
  %v1199 = vsel %vm969, %v1117, 0.0
  %v1200 = vadd.f32 %v1198, %v1199
  %v1201 = vsel %vm969, %v1118, 0.0
  %v1202 = vadd.f32 %v1200, %v1201
  %v1203 = vsel %vm969, %v1119, 0.0
  %v1204 = vadd.f32 %v1202, %v1203
  %v1205 = vsel %vm969, %v1120, 0.0
  %v1206 = vadd.f32 %v1204, %v1205
  %v1207 = vsel %vm969, %v1121, 0.0
  %v1208 = vadd.f32 %v1206, %v1207
  %v1209 = vsel %vm969, %v1122, 0.0
  %v1210 = vadd.f32 %v1208, %v1209
  %v1211 = vsel %vm969, %v1123, 0.0
  %v1212 = vadd.f32 %v1210, %v1211
  %v1213 = vsel %vm969, %v1124, 0.0
  %v1214 = vadd.f32 %v1212, %v1213
  %v1215 = vsel %vm969, %v1125, 0.0
  %v1216 = vadd.f32 %v1214, %v1215
  %v1217 = vsel %vm969, %v1126, 0.0
  %v1218 = vadd.f32 %v1216, %v1217
  %v1219 = vsel %vm969, %v1127, 0.0
  %v1220 = vadd.f32 %v1218, %v1219
  %v1221 = vsel %vm969, %v1128, 0.0
  %v1222 = vadd.f32 %v1220, %v1221
  %v1223 = vsel %vm969, %v1129, 0.0
  %v1224 = vadd.f32 %v1222, %v1223
  %v1225 = vsel %vm969, %v1130, 0.0
  %v1226 = vadd.f32 %v1224, %v1225
  %v1227 = vsel %vm969, %v1131, 0.0
  %v1228 = vadd.f32 %v1226, %v1227
  %v1229 = vsel %vm969, %v1132, 0.0
  %v1230 = vadd.f32 %v1228, %v1229
  %v1231 = vsel %vm969, %v1133, 0.0
  %v1232 = vadd.f32 %v1230, %v1231
  %v1233 = vsel %vm969, %v1134, 0.0
  %v1234 = vadd.f32 %v1232, %v1233
  %v1235 = vsel %vm969, %v1135, 0.0
  %v1236 = vadd.f32 %v1234, %v1235
  %v1237 = vsel %vm969, %v1136, 0.0
  %v1238 = vadd.f32 %v1236, %v1237
  %v1239 = vsel %vm969, %v1137, 0.0
  %v1240 = vadd.f32 %v1238, %v1239
  %v1241 = vsel %vm969, %v1138, 0.0
  %v1242 = vadd.f32 %v1240, %v1241
  %v1243 = vsel %vm969, %v1139, 0.0
  %v1244 = vadd.f32 %v1242, %v1243
  %v1245 = vsel %vm969, %v1140, 0.0
  %v1246 = vadd.f32 %v1244, %v1245
  %v1247 = vsel %vm969, %v1141, 0.0
  %v1248 = vadd.f32 %v1246, %v1247
  %v1249 = vsel %vm969, %v1142, 0.0
  %v1250 = vadd.f32 %v1248, %v1249
  %v1251 = vsel %vm969, %v1143, 0.0
  %v1252 = vadd.f32 %v1250, %v1251
  %v1253 = vsel %vm969, %v1144, 0.0
  %v1254 = vadd.f32 %v1252, %v1253
  %v1255 = vsel %vm969, %v1145, 0.0
  %v1256 = vadd.f32 %v1254, %v1255
  %v1257 = vsel %vm969, %v1146, 0.0
  %v1258 = vadd.f32 %v1256, %v1257
  %v1259 = vsel %vm969, %v1147, 0.0
  %v1260 = vadd.f32 %v1258, %v1259
  %v1261 = vsel %vm969, %v1148, 0.0
  %v1262 = vadd.f32 %v1260, %v1261
  %v1263 = vsel %vm969, %v1149, 0.0
  %v1264 = vadd.f32 %v1262, %v1263
  %v1265 = vsel %vm969, %v1150, 0.0
  %v1266 = vadd.f32 %v1264, %v1265
  %v1267 = vsel %vm969, %v1151, 0.0
  %v1268 = vadd.f32 %v1266, %v1267
  %v1269 = vsel %vm969, %v1152, 0.0
  %v1270 = vadd.f32 %v1268, %v1269
  %v1271 = vsel %vm969, %v1153, 0.0
  %v1272 = vadd.f32 %v1270, %v1271
  %v1273 = vsel %vm969, %v1154, 0.0
  %v1274 = vadd.f32 %v1272, %v1273
  %v1275 = vsel %vm969, %v1155, 0.0
  %v1276 = vadd.f32 %v1274, %v1275
  %v1277 = vsel %vm969, %v1156, 0.0
  %v1278 = vadd.f32 %v1276, %v1277
  %v1279 = vsel %vm969, %v1157, 0.0
  %v1280 = vadd.f32 %v1278, %v1279
  %v1281 = vsel %vm969, %v1158, 0.0
  %v1282 = vadd.f32 %v1280, %v1281
  %v1283 = vsel %vm969, %v1159, 0.0
  %v1284 = vadd.f32 %v1282, %v1283
  %v1285 = vsel %vm969, %v1160, 0.0
  %v1286 = vadd.f32 %v1284, %v1285
  %v1287 = vsel %vm969, %v1161, 0.0
  %v1288 = vadd.f32 %v1286, %v1287
  %s1289 = scalar_lea.vmem %s3, 8
  %1290 = vst.msk [vmem:[%s1289] sm:$0xff] %vm969, %v1288
  // Predicated region
  $region10: #{conv_bn.1} parent=0 // pred_check
    _
  $region11: #{conv_bn.1} parent=0 // pred_check_branch
    %1292 = sbr.rel (0) target = $region13
  $region12: #{conv_bn.1} parent=0 // pred_region
    _
  $region13: #{conv_bn.1} parent=0 // pred_fallthru
    _
  // Predicated region
  $region14: #{conv_bn.1} parent=0 // pred_check
    _
  $region15: #{conv_bn.1} parent=0 // pred_check_branch
    %1294 = sbr.rel (0) target = $region17
  $region16: #{conv_bn.1} parent=0 // pred_region
    _
  $region17: #{conv_bn.1} parent=0 // pred_fallthru
    _
  // Predicated region
  $region18: #{conv_bn.1} parent=0 // pred_check
    _
  $region19: #{conv_bn.1} parent=0 // pred_check_branch
    %1296 = sbr.rel (0) target = $region21
  $region20: #{conv_bn.1} parent=0 // pred_region
    _
  $region21: #{conv_bn.1} parent=0 // pred_fallthru
    _
  // Predicated region
  $region22: #{conv_bn.1} parent=0 // pred_check
    _
  $region23: #{conv_bn.1} parent=0 // pred_check_branch
    %1298 = sbr.rel (0) target = $region25
  $region24: #{conv_bn.1} parent=0 // pred_region
    _
  $region25: #{conv_bn.1} parent=0 // pred_fallthru
    _

</llo_original>
